<compile_context>
chip_gen: v7x
topology: tpu7x:2x2x1
jax: 0.10.0
libtpu: 0.0.40
codegen_flags: <defaults>
</compile_context>

<pallas_src>
import functools

import jax
import jax.numpy as jnp
from jax import lax
from jax.experimental import pallas as pl
from jax.experimental.pallas import tpu as pltpu


def _round_up(x, m):
    return ((x + m - 1) // m) * m


@functools.lru_cache(maxsize=None)
def _tpu_generation():
    try:
        kind = jax.devices()[0].device_kind.lower()
    except Exception:
        return 6
    for g in (7, 6, 5, 4):
        if f"v{g}" in kind:
            return g
    return 6


@functools.lru_cache(maxsize=None)
def _vmem_limit_bytes():
    """Generation-aware VMEM limit: ~110 MiB on v5e/v6e (128 MiB), ~52 MiB on v7x (64 MiB)."""
    cap = None
    try:
        cap = int(pltpu.get_tpu_info().vmem_capacity_bytes)
    except Exception:
        cap = None
    if cap is None or cap < 64 * 1024 * 1024:
        cap = (64 if _tpu_generation() >= 7 else 128) * 1024 * 1024
    return int(min(cap - 12 * 1024 * 1024, 110 * 1024 * 1024))


@functools.lru_cache(maxsize=None)
def _buffered_one_supported():
    """Feature-probe pl.Buffered(1) (single-buffering of grid-invariant operands)."""
    try:
        def _k(x_ref, o_ref):
            o_ref[...] = x_ref[...] + pl.program_id(0).astype(jnp.float32)

        out = pl.pallas_call(
            _k,
            out_shape=jax.ShapeDtypeStruct((16, 128), jnp.float32),
            grid=(2,),
            in_specs=[pl.BlockSpec((8, 128), lambda i: (0, 0),
                                   pipeline_mode=pl.Buffered(1))],
            out_specs=pl.BlockSpec((8, 128), lambda i: (i, 0)),
        )(jnp.ones((8, 128), jnp.float32))
        out = jax.block_until_ready(out)
        return bool(jnp.allclose(out[:8], 1.0) and jnp.allclose(out[8:], 2.0))
    except Exception:
        return False


def _invariant_spec(shape, index_map):
    """BlockSpec for an operand whose block never changes across the grid: single-buffer it
    (double-buffering a constant 8 MiB weight wastes VMEM for zero benefit)."""
    if _buffered_one_supported():
        return pl.BlockSpec(shape, index_map, pipeline_mode=pl.Buffered(1))
    return pl.BlockSpec(shape, index_map)


# ----------------------------------------------------------------------------
# Gate projection kernel: out = sum_i x_i @ W_i + b (hoisted out of the recurrence).
# ----------------------------------------------------------------------------

def _make_gates_kernel(n_inputs):
    def kernel(*refs):
        x_refs = refs[:n_inputs]
        w_refs = refs[n_inputs:2 * n_inputs]
        b_ref = refs[2 * n_inputs]
        o_ref = refs[2 * n_inputs + 1]
        acc = jnp.dot(x_refs[0][...].astype(jnp.bfloat16), w_refs[0][...],
                      preferred_element_type=jnp.float32)
        for x_ref, w_ref in zip(x_refs[1:], w_refs[1:]):
            acc = acc + jnp.dot(x_ref[...].astype(jnp.bfloat16), w_ref[...],
                                preferred_element_type=jnp.float32)
        o_ref[...] = (acc + b_ref[...]).astype(o_ref.dtype)
    return kernel


def gates_proj(x_parts, w_parts, b2d, *, tm=512, out_dtype=jnp.bfloat16):
    """x_parts: list of (N, H_i) f32; w_parts: list of (H_i, G) bf16; b2d: (1, G) f32."""
    n = len(x_parts)
    N = x_parts[0].shape[0]
    G = w_parts[0].shape[1]
    tm = min(tm, _round_up(N, 8))
    Np = _round_up(N, tm)
    if Np != N:
        x_parts = [jnp.pad(x, ((0, Np - N), (0, 0))) for x in x_parts]

    in_specs = ([pl.BlockSpec((tm, x.shape[1]), lambda i: (i, 0)) for x in x_parts]
                + [_invariant_spec(w.shape, lambda i: (0, 0)) for w in w_parts]
                + [_invariant_spec((1, G), lambda i: (0, 0))])
    out = pl.pallas_call(
        _make_gates_kernel(n),
        out_shape=jax.ShapeDtypeStruct((Np, G), out_dtype),
        grid_spec=pltpu.PrefetchScalarGridSpec(
            num_scalar_prefetch=0,
            grid=(Np // tm,),
            in_specs=in_specs,
            out_specs=pl.BlockSpec((tm, G), lambda i: (i, 0))),
        compiler_params=pltpu.CompilerParams(
            dimension_semantics=("parallel",),
            vmem_limit_bytes=_vmem_limit_bytes()),
    )(*x_parts, *w_parts, b2d)
    return out[:N]


# ----------------------------------------------------------------------------
# Recurrent LSTM kernel: only h @ W_hh on the sequential critical path.
# Grid = (batch tiles [parallel], time blocks [arbitrary]); tt timesteps per grid step.
# ----------------------------------------------------------------------------

def _lstm_rec_kernel(gx_ref, whh_ref, y_ref, h_sc, c_sc):
    @pl.when(pl.program_id(1) == 0)
    def _():
        h_sc[...] = jnp.zeros_like(h_sc)
        c_sc[...] = jnp.zeros_like(c_sc)

    H = h_sc.shape[-1]
    tt = gx_ref.shape[0]

    def step(i, carry):
        # Precomputed bf16 gate slab added in f32; W_hh read straight from the ref.
        gates = gx_ref[i].astype(jnp.float32) + jnp.dot(
            h_sc[...].astype(jnp.bfloat16), whh_ref[...],
            preferred_element_type=jnp.float32)
        ig = jax.nn.sigmoid(gates[:, 0 * H:1 * H])
        fg = jax.nn.sigmoid(gates[:, 1 * H:2 * H])
        gg = jnp.tanh(gates[:, 2 * H:3 * H])
        og = jax.nn.sigmoid(gates[:, 3 * H:4 * H])
        c = fg * c_sc[...] + ig * gg
        h = og * jnp.tanh(c)
        h_sc[...] = h
        c_sc[...] = c
        y_ref[i] = h
        return carry

    lax.fori_loop(0, tt, step, 0, unroll=True)


def _pick_tb(B):
    gen = _tpu_generation()
    cores = 2 if gen >= 7 else 1          # v7x: split batch over both TensorCores
    mxu_rows = 128 if gen <= 5 else 256   # fill the 256-wide MXU on v6e/v7x
    if B <= 8:
        return B
    tb = _round_up((B + cores - 1) // cores, 8)
    return max(8, min(tb, mxu_rows))


def lstm_recurrent(gx, w_hh_t, *, tt=4, tb=None):
    """gx: (T, B, 4H) precomputed input gates (bf16); w_hh_t: (H, 4H) bf16 -> y: (T, B, H) f32."""
    T, B, G4 = gx.shape
    H = w_hh_t.shape[0]
    if tb is None:
        tb = _pick_tb(B)
    tb = min(tb, B)
    Bp = _round_up(B, tb)
    if T <= tt:
        tt = T
    Tp = _round_up(T, tt)
    if (Tp, Bp) != (T, B):
        gx = jnp.pad(gx, ((0, Tp - T), (0, Bp - B), (0, 0)))

    y = pl.pallas_call(
        _lstm_rec_kernel,
        out_shape=jax.ShapeDtypeStruct((Tp, Bp, H), jnp.float32),
        grid_spec=pltpu.PrefetchScalarGridSpec(
            num_scalar_prefetch=0,
            grid=(Bp // tb, Tp // tt),
            in_specs=[pl.BlockSpec((tt, tb, G4), lambda b, t: (t, b, 0)),
                      _invariant_spec((H, G4), lambda b, t: (0, 0))],
            out_specs=pl.BlockSpec((tt, tb, H), lambda b, t: (t, b, 0)),
            scratch_shapes=[pltpu.VMEM((tb, H), jnp.float32),
                            pltpu.VMEM((tb, H), jnp.float32)]),
        compiler_params=pltpu.CompilerParams(
            dimension_semantics=("parallel", "arbitrary"),
            vmem_limit_bytes=_vmem_limit_bytes()),
    )(gx, w_hh_t)
    return y[:T, :B]


# ----------------------------------------------------------------------------
# Normalized Bahdanau attention.  Projections are hoisted/batched; the per-batch-element
# kernel only does the tanh score tiles + softmax + context matmul.
# ----------------------------------------------------------------------------

_TQ_CHUNK = 8
_TK_CHUNK = 128


def _attn_kernel(len_ref, pq_ref, pk_ref, att_ref, k_ref, ctx_ref, sc_ref, s_sc):
    b = pl.program_id(0)
    L = len_ref[b]
    Tq = pq_ref.shape[1]
    Tk = pk_ref.shape[1]
    att = att_ref[...]                                             # (1, U)

    nq = Tq // _TQ_CHUNK
    nk = Tk // _TK_CHUNK

    # score(q,k) = att . tanh(pq + pk), computed in (8, 128) tiles via fori_loop + scratch so
    # only one (tq, tk, U) tanh intermediate is live at a time (bounded VMEM working set).
    def q_body(qi, carry):
        q0 = pl.multiple_of(qi * _TQ_CHUNK, _TQ_CHUNK)
        pq = pq_ref[0, pl.ds(q0, _TQ_CHUNK), :]                    # (tq, U)

        def k_body(ki, carry_k):
            k0 = pl.multiple_of(ki * _TK_CHUNK, _TK_CHUNK)
            pk = pk_ref[0, pl.ds(k0, _TK_CHUNK), :]                # (tk, U)
            t = jnp.tanh(pq[:, None, :] + pk[None, :, :])          # (tq, tk, U)
            s_sc[pl.ds(q0, _TQ_CHUNK), pl.ds(k0, _TK_CHUNK)] = jnp.sum(t * att[None], axis=-1)
            return carry_k

        return lax.fori_loop(0, nk, k_body, carry)

    lax.fori_loop(0, nq, q_body, 0)

    scores = s_sc[...]
    kpos = lax.broadcasted_iota(jnp.int32, scores.shape, 1)
    scores = jnp.where(kpos >= L, jnp.float32(-65504.0), scores)

    m = jnp.max(scores, axis=-1, keepdims=True)
    e = jnp.exp(scores - m)
    p = e * pl.reciprocal(jnp.sum(e, axis=-1, keepdims=True), approx=True)

    ctx_ref[0] = jnp.dot(p.astype(jnp.bfloat16), k_ref[0].astype(jnp.bfloat16),
                         preferred_element_type=jnp.float32)       # (Tq, H)
    sc_ref[0] = p


def bahdanau_attention(q_bfirst, k_bfirst, lens, attn_params):
    """q: (B, Tq, H), k: (B, Tk, H) f32, lens: (B,) int32 -> (ctx (B,Tq,H), scores (B,Tq,Tk))."""
    a = attn_params
    B, Tq, H = q_bfirst.shape
    Tk = k_bfirst.shape[1]
    U = a["wq_t"].shape[1]

    # Hoisted batched projections: (B*T, H) @ (H, U) fills the MXU (bias folded into pq).
    pq = gates_proj([q_bfirst.reshape(B * Tq, H)], [a["wq_t"]], a["bias"],
                    out_dtype=jnp.float32).reshape(B, Tq, U)
    pk = gates_proj([k_bfirst.reshape(B * Tk, H)], [a["wk_t"]],
                    jnp.zeros_like(a["bias"]), out_dtype=jnp.float32).reshape(B, Tk, U)

    Tqp = _round_up(Tq, _TQ_CHUNK)
    Tkp = _round_up(Tk, _TK_CHUNK)            # lane-dense scores output -> unmasked stores
    if Tqp != Tq:
        pq = jnp.pad(pq, ((0, 0), (0, Tqp - Tq), (0, 0)))
    if Tkp != Tk:
        pk = jnp.pad(pk, ((0, 0), (0, Tkp - Tk), (0, 0)))
        k_bfirst = jnp.pad(k_bfirst, ((0, 0), (0, Tkp - Tk), (0, 0)))

    grid_spec = pltpu.PrefetchScalarGridSpec(
        num_scalar_prefetch=1,
        grid=(B,),
        in_specs=[
            pl.BlockSpec((1, Tqp, U), lambda b, lens: (b, 0, 0)),
            pl.BlockSpec((1, Tkp, U), lambda b, lens: (b, 0, 0)),
            pl.BlockSpec((1, U), lambda b, lens: (0, 0)),
            pl.BlockSpec((1, Tkp, H), lambda b, lens: (b, 0, 0)),
        ],
        out_specs=[
            pl.BlockSpec((1, Tqp, H), lambda b, lens: (b, 0, 0)),
            pl.BlockSpec((1, Tqp, Tkp), lambda b, lens: (b, 0, 0)),
        ],
        scratch_shapes=[pltpu.VMEM((Tqp, Tkp), jnp.float32)],
    )
    ctx, sc = pl.pallas_call(
        _attn_kernel,
        out_shape=(jax.ShapeDtypeStruct((B, Tqp, H), jnp.float32),
                   jax.ShapeDtypeStruct((B, Tqp, Tkp), jnp.float32)),
        grid_spec=grid_spec,
        compiler_params=pltpu.CompilerParams(
            dimension_semantics=("parallel",),
            vmem_limit_bytes=_vmem_limit_bytes()),
    )(lens, pq, pk, a["att"], k_bfirst)
    return ctx[:, :Tq], sc[:, :Tq, :Tk]


# ----------------------------------------------------------------------------
# Tiled classifier: grid (rows, vocab, hidden) with f32 accumulator scratch.
# Large row tile (1024) so the (H, V) weight is streamed few times.
# ----------------------------------------------------------------------------

def _classifier_kernel(x_ref, w_ref, b_ref, o_ref, acc_ref):
    @pl.when(pl.program_id(2) == 0)
    def _():
        acc_ref[...] = jnp.zeros_like(acc_ref)

    acc_ref[...] += jnp.dot(x_ref[...].astype(jnp.bfloat16), w_ref[...],
                            preferred_element_type=jnp.float32)

    @pl.when(pl.program_id(2) == pl.num_programs(2) - 1)
    def _():
        o_ref[...] = acc_ref[...] + b_ref[...]


def classifier(x2d, w_t, b2d, *, tm=1024, tn=1024):
    """x2d: (N, H) f32; w_t: (H, V) bf16; b2d: (1, V) f32 -> (N, V) f32 logits."""
    N, H = x2d.shape
    V = w_t.shape[1]
    tm = min(tm, _round_up(N, 8))
    Np = _round_up(N, tm)
    Vp = _round_up(V, 128)                        # lane-dense, unmasked stores
    tn_pick = 128
    for cand in (tn, 512, 256, 128):
        if cand <= Vp and Vp % cand == 0:
            tn_pick = cand
            break
    tn = tn_pick
    if H % 512 == 0:
        tk = 512
    elif H % 128 == 0:
        tk = 128
    else:
        tk = H

    x_p = jnp.pad(x2d, ((0, Np - N), (0, 0))) if Np != N else x2d
    w_p = jnp.pad(w_t, ((0, 0), (0, Vp - V))) if Vp != V else w_t
    b_p = jnp.pad(b2d, ((0, 0), (0, Vp - V))) if Vp != V else b2d

    out = pl.pallas_call(
        _classifier_kernel,
        out_shape=jax.ShapeDtypeStruct((Np, Vp), jnp.float32),
        grid_spec=pltpu.PrefetchScalarGridSpec(
            num_scalar_prefetch=0,
            grid=(Np // tm, Vp // tn, H // tk),
            in_specs=[pl.BlockSpec((tm, tk), lambda i, j, k: (i, k)),
                      pl.BlockSpec((tk, tn), lambda i, j, k: (k, j)),
                      pl.BlockSpec((1, tn), lambda i, j, k: (0, j))],
            out_specs=pl.BlockSpec((tm, tn), lambda i, j, k: (i, j)),
            scratch_shapes=[pltpu.VMEM((tm, tn), jnp.float32)]),
        compiler_params=pltpu.CompilerParams(
            dimension_semantics=("parallel", "parallel", "arbitrary"),
            vmem_limit_bytes=_vmem_limit_bytes()),
    )(x_p, w_p, b_p)
    return out[:N, :V]


# ----------------------------------------------------------------------------
# Parameter construction (mirrors the module's __init__ shapes; weights stored bf16)
# ----------------------------------------------------------------------------

def _uniform(key, shape, scale=0.1):
    return jax.random.uniform(key, shape, jnp.float32, -scale, scale)


def _init_lstm_params(key, input_size, hidden_size, split_at=None):
    k1, k2, k3, k4 = jax.random.split(key, 4)
    w_ih = _uniform(k1, (4 * hidden_size, input_size))
    w_hh = _uniform(k2, (4 * hidden_size, hidden_size))
    b_ih = _uniform(k3, (4 * hidden_size,))
    b_hh = _uniform(k4, (4 * hidden_size,))
    out = dict(w_hh_t=w_hh.T.astype(jnp.bfloat16), b=(b_ih + b_hh)[None, :])
    if split_at is None:
        out["w_ih_t"] = w_ih.T.astype(jnp.bfloat16)
    else:
        # input to stacked layers is cat([x, attn]) -> split the weight columns
        out["w_ih_x_t"] = w_ih[:, :split_at].T.astype(jnp.bfloat16)
        out["w_ih_a_t"] = w_ih[:, split_at:].T.astype(jnp.bfloat16)
    return out


def init_params(key, vocab_size, hidden_size, num_layers):
    keys = jax.random.split(key, 8 + num_layers)
    params = {}
    params["embedding"] = _uniform(keys[0], (vocab_size, hidden_size))
    params["att_lstm"] = _init_lstm_params(keys[1], hidden_size, hidden_size)
    # BahdanauAttention(hidden, hidden, hidden, normalize=True)
    wq = _uniform(keys[2], (hidden_size, hidden_size))
    wk = _uniform(keys[3], (hidden_size, hidden_size))
    linear_att = _uniform(keys[4], (hidden_size,))
    normalize_scalar = 1.0 / jnp.sqrt(jnp.float32(hidden_size))
    att_n = linear_att / jnp.linalg.norm(linear_att) * normalize_scalar
    params["attn"] = dict(wq_t=wq.T.astype(jnp.bfloat16),
                          wk_t=wk.T.astype(jnp.bfloat16),
                          bias=jnp.zeros((1, hidden_size), jnp.float32),
                          att=att_n[None, :])
    for i in range(num_layers - 1):
        params[f"rnn{i + 1}"] = _init_lstm_params(
            keys[5 + i], 2 * hidden_size, hidden_size, split_at=hidden_size)
    cw = _uniform(keys[5 + num_layers - 1], (vocab_size, hidden_size))
    cb = _uniform(keys[6 + num_layers - 1], (vocab_size,))
    params["cls_w_t"] = cw.T.astype(jnp.bfloat16)
    params["cls_b"] = cb[None, :]
    return params


# ----------------------------------------------------------------------------
# Decoder forward (Pallas kernels for the hot paths, plain JAX glue elsewhere)
# ----------------------------------------------------------------------------

def decoder_forward(params, inputs, enc_context, enc_len, num_layers):
    """inputs: (T, B) int32 tokens; enc_context: (Tk, B, H); enc_len: (B,) int32."""
    T, B = inputs.shape
    H = params["embedding"].shape[1]
    V = params["cls_b"].shape[1]
    N = T * B

    # Embedding lookup kept as an XLA gather (glue).
    x = params["embedding"][inputs]                               # (T, B, H) f32

    # att_rnn: dropout (identity) -> LSTM with hoisted input projection (bf16 gate slab)
    p = params["att_lstm"]
    g = gates_proj([x.reshape(N, H)], [p["w_ih_t"]], p["b"])
    rnn_out = lstm_recurrent(g.reshape(T, B, 4 * H), p["w_hh_t"])

    ctx_b, sc_b = bahdanau_attention(
        jnp.transpose(rnn_out, (1, 0, 2)),
        jnp.transpose(enc_context, (1, 0, 2)),
        enc_len, params["attn"])
    attn = jnp.transpose(ctx_b, (1, 0, 2))                        # (T, B, H)
    scores = jnp.transpose(sc_b, (1, 0, 2))                       # (T, B, Tk)
    attn2d = attn.reshape(N, H)

    # stacked layers: concat([x, attn]) @ W_ih realized as two dots (no concat in HBM)
    p = params["rnn1"]
    g = gates_proj([rnn_out.reshape(N, H), attn2d],
                   [p["w_ih_x_t"], p["w_ih_a_t"]], p["b"])
    xcur = lstm_recurrent(g.reshape(T, B, 4 * H), p["w_hh_t"])

    for i in range(1, num_layers - 1):
        residual = xcur
        p = params[f"rnn{i + 1}"]
        g = gates_proj([xcur.reshape(N, H), attn2d],
                       [p["w_ih_x_t"], p["w_ih_a_t"]], p["b"])
        xcur = lstm_recurrent(g.reshape(T, B, 4 * H), p["w_hh_t"])
        xcur = xcur + residual

    logits = classifier(xcur.reshape(N, H), params["cls_w_t"], params["cls_b"])
    logits = logits.reshape(T, B, V)
    # TODO(synk): dropout treated as identity (eval); enable_dre / DRE-SVD-KNN-MIPS screening
    # and inference-mode hidden repackaging are not translated (hidden stays None).
    return logits, scores, [enc_context, enc_len, None]


# ----------------------------------------------------------------------------
# Pure-JAX reference (same bf16-weight / bf16-gate-slab numerics) for the correctness check
# ----------------------------------------------------------------------------

def _lstm_ref(x_parts, w_in_parts, b, w_hh_t):
    gx = sum(jnp.dot(xp.astype(jnp.bfloat16), wp, preferred_element_type=jnp.float32)
             for xp, wp in zip(x_parts, w_in_parts)) + b           # (T, B, 4H)
    gx = gx.astype(jnp.bfloat16).astype(jnp.float32)               # kernel stores gx in bf16
    B = gx.shape[1]
    H = w_hh_t.shape[0]

    def step(carry, g_t):
        h, c = carry
        g = g_t + jnp.dot(h.astype(jnp.bfloat16), w_hh_t, preferred_element_type=jnp.float32)
        i, f, gg, o = jnp.split(g, 4, axis=-1)
        c = jax.nn.sigmoid(f) * c + jax.nn.sigmoid(i) * jnp.tanh(gg)
        h = jax.nn.sigmoid(o) * jnp.tanh(c)
        return (h, c), h

    init = (jnp.zeros((B, H), jnp.float32), jnp.zeros((B, H), jnp.float32))
    _, ys = lax.scan(step, init, gx)
    return ys


def _attn_ref(q_bfirst, k_bfirst, lens, a):
    pq = jnp.dot(q_bfirst.astype(jnp.bfloat16), a["wq_t"], preferred_element_type=jnp.float32)
    pk = jnp.dot(k_bfirst.astype(jnp.bfloat16), a["wk_t"], preferred_element_type=jnp.float32)
    s = jnp.tanh(pq[:, :, None, :] + pk[:, None, :, :] + a["bias"][0])
    scores = jnp.sum(s * a["att"][0], axis=-1)
    mask = jnp.arange(k_bfirst.shape[1])[None, None, :] >= lens[:, None, None]
    scores = jnp.where(mask, -65504.0, scores)
    p = jax.nn.softmax(scores, axis=-1)
    ctx = jnp.einsum("bqk,bkh->bqh", p.astype(jnp.bfloat16),
                     k_bfirst.astype(jnp.bfloat16), preferred_element_type=jnp.float32)
    return ctx, p


def ref_forward(params, inputs, enc_context, enc_len, num_layers):
    x = params["embedding"][inputs]
    p = params["att_lstm"]
    rnn_out = _lstm_ref([x], [p["w_ih_t"]], p["b"], p["w_hh_t"])
    ctx_b, sc_b = _attn_ref(jnp.transpose(rnn_out, (1, 0, 2)),
                            jnp.transpose(enc_context, (1, 0, 2)),
                            enc_len, params["attn"])
    attn = jnp.transpose(ctx_b, (1, 0, 2))
    scores = jnp.transpose(sc_b, (1, 0, 2))
    p = params["rnn1"]
    x = _lstm_ref([rnn_out, attn], [p["w_ih_x_t"], p["w_ih_a_t"]], p["b"], p["w_hh_t"])
    for i in range(1, num_layers - 1):
        residual = x
        p = params[f"rnn{i + 1}"]
        x = _lstm_ref([x, attn], [p["w_ih_x_t"], p["w_ih_a_t"]], p["b"], p["w_hh_t"])
        x = x + residual
    logits = (jnp.dot(x.astype(jnp.bfloat16), params["cls_w_t"],
                      preferred_element_type=jnp.float32) + params["cls_b"])
    return logits, scores


# ----------------------------------------------------------------------------

if __name__ == "__main__":
    VOCAB, HIDDEN, NUM_LAYERS = 64, 32, 4
    T, B, TK = 5, 2, 7

    root = jax.random.PRNGKey(0)
    kp, k1, k2 = jax.random.split(root, 3)
    params = init_params(kp, VOCAB, HIDDEN, NUM_LAYERS)

    inputs = jax.random.randint(k1, (T, B), 0, VOCAB, dtype=jnp.int32)
    enc_context = jax.random.normal(k2, (TK, B, HIDDEN), jnp.float32)
    enc_len = jnp.array([TK, 4], dtype=jnp.int32)

    logits, scores, state = decoder_forward(params, inputs, enc_context, enc_len, NUM_LAYERS)
    jax.block_until_ready((logits, scores))

    ref_logits, ref_scores = ref_forward(params, inputs, enc_context, enc_len, NUM_LAYERS)
    assert logits.shape == (T, B, VOCAB) and scores.shape == (T, B, TK)
    assert jnp.allclose(logits, ref_logits, atol=2e-2, rtol=2e-2)
    assert jnp.allclose(scores, ref_scores, atol=2e-2, rtol=2e-2)

    print("KERNEL_OK")
</pallas_src>

<mosaic_0001>
module attributes {stable_mosaic.version = 11 : i64} {
  func.func @_k(%arg0: i32, %arg1: memref<8x128xf32, #tpu.memory_space<vmem>>, %arg2: memref<8x128xf32, #tpu.memory_space<vmem>>) attributes {dimension_semantics = [#tpu.dimension_semantics<arbitrary>], iteration_bounds = array<i64: 2>, scalar_prefetch = 0 : i64, scratch_operands = 0 : i64, tpu.core_type = #tpu.core_type<tc>, window_params = [{pipeline_mode = #tpu.pipeline_mode<synchronous>, transform_indices = @transform_0, window_bounds = array<i64: 8, 128>}, {transform_indices = @transform_1, window_bounds = array<i64: 8, 128>}]} {
    %c0 = arith.constant 0 : index
    %c0_0 = arith.constant 0 : index
    %0 = vector.load %arg1[%c0, %c0_0] : memref<8x128xf32, #tpu.memory_space<vmem>>, vector<8x128xf32>
    %1 = arith.sitofp %arg0 : i32 to f32
    %2 = vector.broadcast %1 : f32 to vector<8x128xf32>
    %3 = arith.addf %0, %2 : vector<8x128xf32>
    %c0_1 = arith.constant 0 : index
    %c0_2 = arith.constant 0 : index
    %4 = vector.load %arg2[%c0_1, %c0_2] : memref<8x128xf32, #tpu.memory_space<vmem>>, vector<8x128xf32>
    tpu.vector_store %arg2[%c0_1, %c0_2], %3 {strides = array<i32>} : memref<8x128xf32, #tpu.memory_space<vmem>>, vector<8x128xf32>,
    return
  }
  func.func @transform_0(%arg0: i32) -> (i32, i32) {
    %c0_i32 = arith.constant 0 : i32
    %c0_i32_0 = arith.constant 0 : i32
    %c0_i32_1 = arith.constant 0 : i32
    return %c0_i32, %c0_i32_0 : i32, i32
  }
  func.func @transform_1(%arg0: i32) -> (i32, i32) {
    %c0_i32 = arith.constant 0 : i32
    %c0_i32_0 = arith.constant 0 : i32
    return %arg0, %c0_i32 : i32, i32
  }
}

module attributes {stable_mosaic.version = 11 : i64} {
  func.func @kernel(%arg0: i32, %arg1: memref<16x32xf32, #tpu.memory_space<vmem>>, %arg2: memref<32x128xbf16, #tpu.memory_space<vmem>>, %arg3: memref<1x128xf32, #tpu.memory_space<vmem>>, %arg4: memref<16x128xbf16, #tpu.memory_space<vmem>>) attributes {dimension_semantics = [#tpu.dimension_semantics<parallel>], iteration_bounds = array<i64: 1>, scalar_prefetch = 0 : i64, scratch_operands = 0 : i64, tpu.core_type = #tpu.core_type<tc>, window_params = [{transform_indices = @transform_0, window_bounds = array<i64: 16, 32>}, {pipeline_mode = #tpu.pipeline_mode<synchronous>, transform_indices = @transform_1, window_bounds = array<i64: 32, 128>}, {pipeline_mode = #tpu.pipeline_mode<synchronous>, transform_indices = @transform_2, window_bounds = array<i64: 1, 128>}, {transform_indices = @transform_3, window_bounds = array<i64: 16, 128>}]} {
    %c0 = arith.constant 0 : index
    %c0_0 = arith.constant 0 : index
    %0 = vector.load %arg1[%c0, %c0_0] : memref<16x32xf32, #tpu.memory_space<vmem>>, vector<16x32xf32>
    %1 = arith.truncf %0 : vector<16x32xf32> to vector<16x32xbf16>
    %c0_1 = arith.constant 0 : index
    %c0_2 = arith.constant 0 : index
    %2 = vector.load %arg2[%c0_1, %c0_2] : memref<32x128xbf16, #tpu.memory_space<vmem>>, vector<32x128xbf16>
    %cst = arith.constant dense<0.000000e+00> : vector<16x128xf32>
    %3 = tpu.matmul %1, %2, %cst {dimension_numbers = #tpu.dot_dimension_numbers<[1], [0], [0], [1], [0, 0, 1, 1], [], []>} : vector<16x32xbf16>, vector<32x128xbf16>, vector<16x128xf32> -> vector<16x128xf32>
    %c0_3 = arith.constant 0 : index
    %c0_4 = arith.constant 0 : index
    %4 = vector.load %arg3[%c0_3, %c0_4] : memref<1x128xf32, #tpu.memory_space<vmem>>, vector<1x128xf32>
    %5 = vector.broadcast %4 : vector<1x128xf32> to vector<16x128xf32>
    %6 = arith.addf %3, %5 : vector<16x128xf32>
    %7 = arith.truncf %6 : vector<16x128xf32> to vector<16x128xbf16>
    %c0_5 = arith.constant 0 : index
    %c0_6 = arith.constant 0 : index
    %8 = vector.load %arg4[%c0_5, %c0_6] : memref<16x128xbf16, #tpu.memory_space<vmem>>, vector<16x128xbf16>
    tpu.vector_store %arg4[%c0_5, %c0_6], %7 {strides = array<i32>} : memref<16x128xbf16, #tpu.memory_space<vmem>>, vector<16x128xbf16>,
    return
  }
  func.func @transform_0(%arg0: i32) -> (i32, i32) {
    %c0_i32 = arith.constant 0 : i32
    %c0_i32_0 = arith.constant 0 : i32
    return %arg0, %c0_i32 : i32, i32
  }
  func.func @transform_1(%arg0: i32) -> (i32, i32) {
    %c0_i32 = arith.constant 0 : i32
    %c0_i32_0 = arith.constant 0 : i32
    %c0_i32_1 = arith.constant 0 : i32
    return %c0_i32, %c0_i32_0 : i32, i32
  }
  func.func @transform_2(%arg0: i32) -> (i32, i32) {
    %c0_i32 = arith.constant 0 : i32
    %c0_i32_0 = arith.constant 0 : i32
    %c0_i32_1 = arith.constant 0 : i32
    return %c0_i32, %c0_i32_0 : i32, i32
  }
  func.func @transform_3(%arg0: i32) -> (i32, i32) {
    %c0_i32 = arith.constant 0 : i32
    %c0_i32_0 = arith.constant 0 : i32
    return %arg0, %c0_i32 : i32, i32
  }
}

</mosaic_0001>

<llo_original>
// kernel: tpu_custom_call.1
$region0: #{tpu_custom_call.1}
  #allocation0 [shape = 'u32[]', space=smem, size = 0x4, offset = 0x4, fixed_abs, tag = 'smem constant byte address 0x4 - core index']
  #allocation1 [shape = 'u32[144,128]{1,0:T(1,128)}', space=vmem, size = 0x12000, scoped, tag = 'internal scratch']
  %s0 = inlined_call_operand.hbm [shape: f32[8,128], index: 0, kind: input, shape index: {}]
  %s1 = inlined_call_operand.hbm [shape: f32[16,128], index: 1, kind: output, shape index: {}]
  %s2 = sld [smem:[#allocation0]]
  $region41: #{tpu_custom_call.1} parent=0
    _
  %s4 = ssub.s32 1, %s2
  %s5 = scalar_select 0, %s4, %s2
  $region1: #{tpu_custom_call.1} parent=0
    #allocation2 [shape = 'u8[4096]{0}', space=vmem, size = 0x1000, scoped, tag = 'input window, operand 0, single buffered']
    #allocation3 [shape = 's32[2]{0}', space=sflag, size = 0x8, scoped, tag = 'scoped memory for tpu_custom_call.1']
    #allocation4 [shape = 's32[2]{0}', space=sflag, size = 0x8, scoped, tag = 'scoped memory for tpu_custom_call.1']
    #allocation5 [shape = 'u8[8192]{0}', space=vmem, size = 0x2000, scoped, tag = 'output window, operand 0']
    %6 = vsyncpa [#allocation3], 0
    %7 = vsyncpa [#allocation4], 0
    %s8 = scalar_lea.sflag [#allocation4], 1
    %9 = vsyncpa %s8, 0
    loop: start=0, step=1, limit=4
    $region2: #{tpu_custom_call.1} parent=1 // loop_pre_header
      _
    $region3: #{tpu_custom_call.1} parent=1 // loop_header
      %s11 = sphi 0, %s15
      %p12 = scmp.ge.s32.totalorder %s11, 4
      %s19 = sphi 0, %s19
      %s21 = sphi 0, %s19
      %s22 = sphi 0, %s21
      %s36 = sphi 0, %s22
      %s42 = sphi 0, %s44
      %s45 = sphi 0, %s42
      %s46 = sphi 0, %s45
      %s62 = sphi 0, %s46
    $region4: #{tpu_custom_call.1} parent=1 // loop_header_branch
      %14 = sbr.rel (%p12) target = $region8
    $region5: #{tpu_custom_call.1} parent=1 // loop_body
      %s16 = ssub.s32 %s11, 1
      %s17 = ssub.s32 %s11, 2
      %s18 = sadd.s32 %s11, 1
      %s20 = sadd.s32 %s19, 1
      %p23 = scmp.eq.s32.totalorder %s11, 1
      %p24 = scmp.ne.s32.totalorder %s19, %s21
      %p25 = scmp.eq.s32.totalorder %s11, 0
      %p26 = por %p24, %p25
      %p27 = scmp.ne.s32.totalorder %s19, %s21
      %p28 = scmp.eq.s32.totalorder %s16, 1
      %p29 = por %p27, %p28
      %p30 = scmp.ne.s32.totalorder %s21, %s22
      %p31 = scmp.eq.s32.totalorder %s16, 0
      %p32 = por %p30, %p31
      %p33 = scmp.ne.s32.totalorder %s21, %s22
      %p34 = scmp.eq.s32.totalorder %s17, 1
      %p35 = por %p33, %p34
      %p37 = scmp.ne.s32.totalorder %s22, %s36
      %p38 = scmp.eq.s32.totalorder %s17, 0
      %p39 = por %p37, %p38
      %s40 = ssub.s32 %s11, %s18
      %p41 = scmp.eq.s32.totalorder %s40, 0
      %s43 = sadd.s32 %s42, 1
      %s44 = scalar_select %p41, %s42, %s43
      %p47 = pneg %p41
      %p48 = scmp.eq.s32.totalorder %s11, 1
      %p49 = por %p47, %p48
      %p50 = scmp.ne.s32.totalorder %s42, %s45
      %p51 = scmp.eq.s32.totalorder %s11, 0
      %p52 = por %p50, %p51
      %p53 = scmp.ne.s32.totalorder %s42, %s45
      %p54 = scmp.eq.s32.totalorder %s16, 1
      %p55 = por %p53, %p54
      %p56 = scmp.ne.s32.totalorder %s45, %s46
      %p57 = scmp.eq.s32.totalorder %s16, 0
      %p58 = por %p56, %p57
      %p59 = scmp.ne.s32.totalorder %s45, %s46
      %p60 = scmp.eq.s32.totalorder %s17, 1
      %p61 = por %p59, %p60
      %p63 = scmp.ne.s32.totalorder %s46, %s62
      %p64 = scmp.eq.s32.totalorder %s17, 0
      %p65 = por %p63, %p64
      %p66 = scmp.le.s32.totalorder 1, %s11
      %p67 = scmp.lt.s32.totalorder %s11, 3
      %p68 = pnand %p66, %p67
      %p69 = pneg %p68
      // Predicated region
      $region9: #{tpu_custom_call.1} parent=5 // pred_check
        _
      $region10: #{tpu_custom_call.1} parent=5 // pred_check_branch
        %71 = sbr.rel (%p68) target = $region12
      $region11: #{tpu_custom_call.1} parent=5 // pred_region
        %s72 = ssub.s32 %s11, 1
        // Predicated region
        $region13: #{tpu_custom_call.1} parent=11 // pred_check
          %p73 = pneg %p32
        $region14: #{tpu_custom_call.1} parent=11 // pred_check_branch
          %75 = sbr.rel (%p73) target = $region16
        $region15: #{tpu_custom_call.1} parent=11 // pred_region
          %s77 = ssub.s32 128, 128
          %78 = vsyncadd [#allocation3], %s77
          %s80 = sshll.u32 [#allocation2], 4
          %s81 = int_to_ptr.vmem [resolvable:$true] %s80
          %83 = dma.hbm_to_vmem [thread:$0]  %s0, 128, %s81, [#allocation3]
        $region16: #{tpu_custom_call.1} parent=11 // pred_fallthru
          _
      $region12: #{tpu_custom_call.1} parent=5 // pred_fallthru
        _
      %p84 = scmp.lt.s32.totalorder %s11, 2
      // Predicated region
      $region17: #{tpu_custom_call.1} parent=5 // pred_check
        %p85 = pneg %p84
      $region18: #{tpu_custom_call.1} parent=5 // pred_check_branch
        %87 = sbr.rel (%p85) target = $region20
      $region19: #{tpu_custom_call.1} parent=5 // pred_region
        _
      $region20: #{tpu_custom_call.1} parent=5 // pred_fallthru
        _
      %p88 = scmp.le.s32.totalorder 1, %s11
      %p89 = scmp.lt.s32.totalorder %s11, 3
      %p90 = pnand %p88, %p89
      %p91 = pneg %p90
      // Predicated region
      $region21: #{tpu_custom_call.1} parent=5 // pred_check
        _
      $region22: #{tpu_custom_call.1} parent=5 // pred_check_branch
        %93 = sbr.rel (%p90) target = $region24
      $region23: #{tpu_custom_call.1} parent=5 // pred_region
        %s94 = ssub.s32 %s11, 1
        // Predicated region
        $region25: #{tpu_custom_call.1} parent=23 // pred_check
          %p95 = pneg %p32
        $region26: #{tpu_custom_call.1} parent=23 // pred_check_branch
          %97 = sbr.rel (%p95) target = $region28
        $region27: #{tpu_custom_call.1} parent=23 // pred_region
          %98 = dma.done [#allocation3], 128
        $region28: #{tpu_custom_call.1} parent=23 // pred_fallthru
          _
        %p99 = pneg %p32
        %p100 = pneg %p29
        %p101 = pneg %p58
        %p102 = pneg %p55
        %s103 = sand.u32 %s45, 1
        %s104 = scalar_lea.sflag [#allocation4], %s103
        %s105 = sand.u32 %s45, 1
        %s106 = smul.addr %s105, 8
        %s107 = scalar_lea.vmem [#allocation5], %s106
        %v108 = vld [vmem:[#allocation2] sm:$0xff]
        %s109 = scvt.s32.f32 %s16
        %v110 = vstv %s109
        %v111 = vadd.f32 %v108, %v110
        %112 = vst [vmem:[%s107] sm:$0xff] %v111
        %s113 = sand.u32 %s45, 1
        %s114 = scalar_lea.sflag [#allocation4], %s113
        %s115 = sand.u32 %s45, 1
        %s116 = smul.addr %s115, 8
        %s117 = scalar_lea.vmem [#allocation5], %s116
        // Predicated region
        $region29: #{tpu_custom_call.1} parent=23 // pred_check
          %p118 = pneg %p55
        $region30: #{tpu_custom_call.1} parent=23 // pred_check_branch
          %120 = sbr.rel (%p118) target = $region32
        $region31: #{tpu_custom_call.1} parent=23 // pred_region
          %s122 = ssub.s32 128, 128
          %123 = vsyncadd %s114, %s122
          %s124 = smul.addr %s16, 128
          %s125 = scalar_lea.hbm %s1, %s124
          %s127 = sshll.u32 %s117, 4
          %s128 = int_to_ptr.vmem [resolvable:$true] %s127
          %130 = dma.vmem_to_hbm [thread:$0]  %s128, 128, %s125, %s114
        $region32: #{tpu_custom_call.1} parent=23 // pred_fallthru
          _
      $region24: #{tpu_custom_call.1} parent=5 // pred_fallthru
        _
      %p131 = scmp.le.s32.totalorder 2, %s11
      // Predicated region
      $region33: #{tpu_custom_call.1} parent=5 // pred_check
        %p132 = pneg %p131
      $region34: #{tpu_custom_call.1} parent=5 // pred_check_branch
        %134 = sbr.rel (%p132) target = $region36
      $region35: #{tpu_custom_call.1} parent=5 // pred_region
        %s135 = ssub.s32 %s11, 2
        // Predicated region
        $region37: #{tpu_custom_call.1} parent=35 // pred_check
          %p136 = pneg %p61
        $region38: #{tpu_custom_call.1} parent=35 // pred_check_branch
          %138 = sbr.rel (%p136) target = $region40
        $region39: #{tpu_custom_call.1} parent=35 // pred_region
          %s139 = sand.u32 %s46, 1
          %s140 = scalar_lea.sflag [#allocation4], %s139
          %s141 = sand.u32 %s46, 1
          %s142 = smul.addr %s141, 8
          %s143 = scalar_lea.vmem [#allocation5], %s142
          %144 = dma.done %s140, 128
        $region40: #{tpu_custom_call.1} parent=35 // pred_fallthru
          _
      $region36: #{tpu_custom_call.1} parent=5 // pred_fallthru
        _
    $region6: #{tpu_custom_call.1} parent=1 // loop_footer
      %s15 = sadd.s32 1, %s11
    $region7: #{tpu_custom_call.1} parent=1 // loop_footer_branch
      %10 = sbr.rel target = $region3
    $region8: #{tpu_custom_call.1} parent=1 // loop_exit
      _
    %145 = vsyncpa [#allocation3], 1
    %s146 = scalar_lea.sflag [#allocation3], 1
    %147 = vsyncpa %s146, 1
    %148 = vsyncpa [#allocation4], 1
    %s149 = scalar_lea.sflag [#allocation4], 1
    %150 = vsyncpa %s149, 1

// kernel: tpu_custom_call.1
$region0: #{tpu_custom_call.1}
  #allocation0 [shape = 'u32[]', space=smem, size = 0x4, offset = 0x4, fixed_abs, tag = 'smem constant byte address 0x4 - core index']
  #allocation1 [shape = 'u32[144,128]{1,0:T(1,128)}', space=vmem, size = 0x12000, scoped, tag = 'internal scratch']
  %s0 = inlined_call_operand.hbm [shape: f32[16,32], index: 0, kind: input, shape index: {}]
  %s1 = inlined_call_operand.hbm [shape: bf16[32,128], index: 1, kind: input, shape index: {}]
  %s2 = inlined_call_operand.hbm [shape: f32[1,128], index: 2, kind: input, shape index: {}]
  %s3 = inlined_call_operand.hbm [shape: bf16[16,128], index: 3, kind: output, shape index: {}]
  %s4 = sld [smem:[#allocation0]]
  $region34: #{tpu_custom_call.1} parent=0
    _
  %s6 = ssub.s32 1, %s4
  %s7 = scalar_select 0, %s6, %s4
  $region1: #{tpu_custom_call.1} parent=0
    #allocation2 [shape = 'u8[8192]{0}', space=vmem, size = 0x2000, scoped, tag = 'input window, operand 0, single buffered']
    #allocation3 [shape = 's32[1]{0}', space=sflag, size = 0x4, scoped, tag = 'scoped memory for tpu_custom_call.1']
    #allocation4 [shape = 's32[1]{0}', space=sflag, size = 0x4, scoped, tag = 'scoped memory for tpu_custom_call.1']
    #allocation5 [shape = 'u8[8192]{0}', space=vmem, size = 0x2000, scoped, tag = 'input window, operand 1, single buffered']
    #allocation6 [shape = 's32[1]{0}', space=sflag, size = 0x4, scoped, tag = 'scoped memory for tpu_custom_call.1']
    #allocation7 [shape = 'u8[512]{0}', space=vmem, size = 0x400, scoped, tag = 'input window, operand 2, single buffered']
    #allocation8 [shape = 'u8[4096]{0}', space=vmem, size = 0x1000, scoped, tag = 'output window, operand 0, single buffered']
    %8 = vsyncpa [#allocation3], 0
    %9 = vsyncpa [#allocation6], 0
    %10 = vsyncpa [#allocation4], 0
    // Predicated region
    $region2: #{tpu_custom_call.1} parent=1 // pred_check
      _
    $region3: #{tpu_custom_call.1} parent=1 // pred_check_branch
      %12 = sbr.rel (0) target = $region5
    $region4: #{tpu_custom_call.1} parent=1 // pred_region
      %s14 = ssub.s32 256, 256
      %15 = vsyncadd [#allocation3], %s14
      %s16 = sshll.u32 [#allocation2], 4
      %s17 = int_to_ptr.vmem [resolvable:$true] %s16
      %22 = dma.hbm_to_vmem [thread:$0]  %s0, 256, %s17, [#allocation3], 128, 128, 8
    $region5: #{tpu_custom_call.1} parent=1 // pred_fallthru
      _
    // Predicated region
    $region6: #{tpu_custom_call.1} parent=1 // pred_check
      _
    $region7: #{tpu_custom_call.1} parent=1 // pred_check_branch
      %24 = sbr.rel (0) target = $region9
    $region8: #{tpu_custom_call.1} parent=1 // pred_region
      %s26 = ssub.s32 256, 256
      %27 = vsyncadd [#allocation6], %s26
      %s28 = sshll.u32 [#allocation5], 4
      %s29 = int_to_ptr.vmem [resolvable:$true] %s28
      %34 = dma.hbm_to_vmem [thread:$0]  %s1, 256, %s29, [#allocation6], 64, 64, 4
    $region9: #{tpu_custom_call.1} parent=1 // pred_fallthru
      _
    // Predicated region
    $region10: #{tpu_custom_call.1} parent=1 // pred_check
      _
    $region11: #{tpu_custom_call.1} parent=1 // pred_check_branch
      %36 = sbr.rel (0) target = $region13
    $region12: #{tpu_custom_call.1} parent=1 // pred_region
      %s38 = ssub.s32 16, 16
      %39 = vsyncadd [#allocation6], %s38
      %s41 = sshll.u32 [#allocation7], 4
      %s42 = int_to_ptr.vmem [resolvable:$true] %s41
      %44 = dma.hbm_to_vmem [thread:$0]  %s2, 16, %s42, [#allocation6]
    $region13: #{tpu_custom_call.1} parent=1 // pred_fallthru
      _
    // Predicated region
    $region14: #{tpu_custom_call.1} parent=1 // pred_check
      _
    $region15: #{tpu_custom_call.1} parent=1 // pred_check_branch
      %46 = sbr.rel (0) target = $region17
    $region16: #{tpu_custom_call.1} parent=1 // pred_region
      %47 = dma.done [#allocation3], 256
    $region17: #{tpu_custom_call.1} parent=1 // pred_fallthru
      _
    // Predicated region
    $region18: #{tpu_custom_call.1} parent=1 // pred_check
      _
    $region19: #{tpu_custom_call.1} parent=1 // pred_check_branch
      %49 = sbr.rel (0) target = $region21
    $region20: #{tpu_custom_call.1} parent=1 // pred_region
      %50 = dma.done [#allocation6], 256
    $region21: #{tpu_custom_call.1} parent=1 // pred_fallthru
      _
    // Predicated region
    $region22: #{tpu_custom_call.1} parent=1 // pred_check
      _
    $region23: #{tpu_custom_call.1} parent=1 // pred_check_branch
      %52 = sbr.rel (0) target = $region25
    $region24: #{tpu_custom_call.1} parent=1 // pred_region
      %53 = dma.done [#allocation6], 16
    $region25: #{tpu_custom_call.1} parent=1 // pred_fallthru
      _
    %v55 = vld [vmem:[#allocation2] sm:$0xff]
    %v56 = vld [vmem:[#allocation2 + $0x8] sm:$0xff]
    %v57 = vpack.c.bf16 %v56, %v55
    %v58 = vld [vmem:[#allocation5] sm:$0xf]
    %v59 = vld [vmem:[#allocation5 + $0x4] sm:$0xf]
    %v60 = vld [vmem:[#allocation5 + $0x8] sm:$0xf]
    %v61 = vld [vmem:[#allocation5 + $0xc] sm:$0xf]
    %v62 = vld [vmem:[#allocation7] sm:$0x1]
    %v64 = vlaneseq
    %v65 = vshrl.u32 %v64, 7
    %v66 = vsub.s32 0, %v65
    %v67 = vrot.slane %v62, %v66
    %v73 = vunpack.c.l.b16 %v58
    %v74 = vunpack.c.l.b16 %v59
    %v75 = vunpack.c.l.b16 %v60
    %v76 = vunpack.c.l.b16 %v61
    %v77 = vpack.c.b16 %v74, %v73
    %v78 = vpack.c.b16 %v76, %v75
    %vm81 = vcmask 261120
    %v83 = vsel %vm81, %v57, 0
    %85 = vmatprep.subr.bf16.mxu0 0
    %86 = vmatpush1.bf16.msra.mxu0 %v77
    %87 = vmatprep.subr.bf16.mxu0 0
    %88 = vmatpush1.bf16.msra.mxu0 %v78
    %89 = vmatprep.subr.bf16.mxu0 0
    %90 = vmatpush1.bf16.msra.mxu0 0
    %91 = vmatprep.subr.bf16.mxu0 0
    %92 = vmatpush1.bf16.msra.mxu0 0
    %93 = vmatprep.subr.bf16.mxu0 0
    %94 = vmatpush1.bf16.msra.mxu0 0
    %95 = vmatprep.subr.bf16.mxu0 0
    %96 = vmatpush1.bf16.msra.mxu0 0
    %97 = vmatprep.subr.bf16.mxu0 0
    %98 = vmatpush1.bf16.msra.mxu0 0
    %99 = vmatprep.subr.bf16.mxu0 0
    %100 = vmatpush1.bf16.msra.mxu0 0
    %101 = vmatprep.subr.bf16.mxu0 0
    %102 = vmatpush1.bf16.msra.mxu0 0
    %103 = vmatprep.subr.bf16.mxu0 0
    %104 = vmatpush1.bf16.msra.mxu0 0
    %105 = vmatprep.subr.bf16.mxu0 0
    %106 = vmatpush1.bf16.msra.mxu0 0
    %107 = vmatprep.subr.bf16.mxu0 0
    %108 = vmatpush1.bf16.msra.mxu0 0
    %109 = vmatprep.subr.bf16.mxu0 0
    %110 = vmatpush1.bf16.msra.mxu0 0
    %111 = vmatprep.subr.bf16.mxu0 0
    %112 = vmatpush1.bf16.msra.mxu0 0
    %113 = vmatprep.subr.bf16.mxu0 0
    %114 = vmatpush1.bf16.msra.mxu0 0
    %115 = vmatprep.subr.bf16.mxu0 0
    %116 = vmatpush1.bf16.msra.mxu0 0
    %117 = vmatprep.mubr.bf16.mxu0 0
    %118 = vmatmul.mubr.bf16.gmra.mrb[0].mxu0 %v83
    %v119 = vpop.f32.mrb[0].mxu0
    %v120 = vadd.f32 %v67, %v119
    %v121 = vpop.f32.mrb[0].mxu0
    %v122 = vpop.f32.mrb[0].mxu0
    %v123 = vadd.f32 %v67, %v122
    %v124 = vpop.f32.mrb[0].mxu0
    %125 = vdwg.mxu0
    %v126 = vpack.c.bf16 %v123, %v120
    %v128 = vunpack.c.l.b16 %v126
    %v129 = vunpack.c.h.b16 %v126
    %v130 = vpack.c.b16 %v128, %v128
    %v131 = vpack.c.b16 %v129, %v129
    %134 = vst [vmem:[#allocation8] sm:$0xf] %v130
    %135 = vst [vmem:[#allocation8 + $0x4] sm:$0xf] %v131
    // Predicated region
    $region26: #{tpu_custom_call.1} parent=1 // pred_check
      _
    $region27: #{tpu_custom_call.1} parent=1 // pred_check_branch
      %137 = sbr.rel (0) target = $region29
    $region28: #{tpu_custom_call.1} parent=1 // pred_region
      %s139 = ssub.s32 128, 128
      %140 = vsyncadd [#allocation4], %s139
      %s141 = sshll.u32 [#allocation8], 4
      %s142 = int_to_ptr.vmem [resolvable:$true] %s141
      %147 = dma.vmem_to_hbm [thread:$0]  %s142, 128, %s3, [#allocation4], 64, 64, 4
    $region29: #{tpu_custom_call.1} parent=1 // pred_fallthru
      _
    // Predicated region
    $region30: #{tpu_custom_call.1} parent=1 // pred_check
      _
    $region31: #{tpu_custom_call.1} parent=1 // pred_check_branch
      %149 = sbr.rel (0) target = $region33
    $region32: #{tpu_custom_call.1} parent=1 // pred_region
      %150 = dma.done [#allocation4], 128
    $region33: #{tpu_custom_call.1} parent=1 // pred_fallthru
      _
    %151 = vsyncpa [#allocation3], 1
    %152 = vsyncpa [#allocation6], 1
    %153 = vsyncpa [#allocation4], 1

</llo_original>
